<compile_context>
chip_gen: v7x
topology: tpu7x:2x2x1
jax: 0.10.0
libtpu: 0.0.40
codegen_flags: <defaults>
</compile_context>

<pallas_src>
import math
import jax
import jax.numpy as jnp
from jax.experimental import pallas as pl
from jax.experimental.pallas import tpu as pltpu


def _round_up(v, m):
    return (v + m - 1) // m * m


def _pick_tile(dim_padded, max_tile, min_blocks=1):
    """Largest multiple of 128 that divides dim_padded, <= max_tile, and (if
    possible) leaves at least `min_blocks` grid blocks along this axis."""
    upper = min(max_tile, dim_padded)
    if min_blocks > 1 and dim_padded >= 128 * min_blocks:
        upper = min(upper, dim_padded // min_blocks)
    upper = max(128, (upper // 128) * 128)
    t = upper
    while dim_padded % t != 0:
        t -= 128
    return t


# ----------------------------- Pallas kernels ------------------------------ #
def _noisy_linear_train_kernel(x_ref, wmu_ref, wsig_ref, ein_ref, eout_ref,
                               bias_ref, o_ref):
    # Grid = (N blocks, K blocks); output block index ignores K, so o_ref is
    # VMEM-resident across the reduction and doubles as the f32 accumulator.
    k = pl.program_id(1)

    @pl.when(k == 0)
    def _():
        # Initialize the accumulator with the (already combined) noisy bias.
        o_ref[...] = jnp.broadcast_to(bias_ref[...], o_ref.shape)

    x = x_ref[...]                                           # (Bp, TK) bf16
    mu_part = jnp.dot(x, wmu_ref[...],
                      preferred_element_type=jnp.float32)    # (Bp, TN) f32
    sig_part = jnp.dot(x * ein_ref[...], wsig_ref[...],
                       preferred_element_type=jnp.float32)   # (Bp, TN) f32
    o_ref[...] += mu_part + eout_ref[...] * sig_part


def _noisy_linear_eval_kernel(x_ref, wmu_ref, bias_ref, o_ref):
    k = pl.program_id(1)

    @pl.when(k == 0)
    def _():
        o_ref[...] = jnp.broadcast_to(bias_ref[...], o_ref.shape)

    o_ref[...] += jnp.dot(x_ref[...], wmu_ref[...],
                          preferred_element_type=jnp.float32)


# -------------------- one-time parameter preparation ----------------------- #
def prepare_noisy_linear(params, compute_dtype=jnp.bfloat16):
    """Pad / transpose / cast parameters once (static between noise resets)."""
    out_dim, in_dim = params["weight_mu"].shape
    Kp = _round_up(in_dim, 128)
    Np = _round_up(out_dim, 128)
    f32 = jnp.float32
    cd = compute_dtype

    # K-major (in, out) layout so the kernel does a canonical (M,K)x(K,N) dot.
    wmu_t = jnp.zeros((Kp, Np), cd).at[:in_dim, :out_dim].set(
        params["weight_mu"].T.astype(cd))
    wsig_t = jnp.zeros((Kp, Np), cd).at[:in_dim, :out_dim].set(
        params["weight_sigma"].T.astype(cd))
    ein_row = jnp.zeros((1, Kp), cd).at[0, :in_dim].set(
        params["eps_in"].astype(cd))
    eout_row = jnp.zeros((1, Np), f32).at[0, :out_dim].set(params["eps_out"])
    bias_noisy = jnp.zeros((1, Np), f32).at[0, :out_dim].set(
        params["bias_mu"] + params["bias_sigma"] * params["bias_epsilon"])
    bias_mu_row = jnp.zeros((1, Np), f32).at[0, :out_dim].set(params["bias_mu"])

    return dict(wmu_t=wmu_t, wsig_t=wsig_t, ein_row=ein_row, eout_row=eout_row,
                bias_noisy=bias_noisy, bias_mu_row=bias_mu_row,
                in_dim=in_dim, out_dim=out_dim, Kp=Kp, Np=Np,
                compute_dtype=cd)


# ------------------------------- wrapper ----------------------------------- #
def noisy_linear_forward(x, prepared, training=True,
                         tile_n=512, tile_k=2048, vmem_limit_bytes=None):
    """Pallas forward of NoisyLinear.

    x: (B, in_dim) f32. `prepared` comes from prepare_noisy_linear().
    training=True uses weight_mu + weight_sigma * outer(eps_out, eps_in) and
    the noisy bias; training=False uses the mu parameters only.
    Returns (B, out_dim) f32.
    """
    B, in_dim = x.shape
    assert in_dim == prepared["in_dim"]
    out_dim, Kp, Np = prepared["out_dim"], prepared["Kp"], prepared["Np"]
    cd = prepared["compute_dtype"]
    f32 = jnp.float32

    Bp = _round_up(max(B, 1), 8)
    xp = jnp.zeros((Bp, Kp), cd).at[:B, :in_dim].set(x.astype(cd))

    # Eval streams only one weight matrix -> double the K tile in the same
    # VMEM budget. Keep >=2 blocks on the parallel N axis for v7x megacore.
    tk_cap = tile_k if training else 2 * tile_k
    TN = _pick_tile(Np, tile_n, min_blocks=2)
    TK = _pick_tile(Kp, tk_cap)
    grid = (Np // TN, Kp // TK)

    x_spec = pl.BlockSpec((Bp, TK), lambda n, k: (0, k))
    w_spec = pl.BlockSpec((TK, TN), lambda n, k: (k, n))
    row_k_spec = pl.BlockSpec((1, TK), lambda n, k: (0, k))   # eps_in row
    row_n_spec = pl.BlockSpec((1, TN), lambda n, k: (0, n))   # eps_out / bias
    out_spec = pl.BlockSpec((Bp, TN), lambda n, k: (0, n))

    cp_kwargs = dict(dimension_semantics=("parallel", "arbitrary"))
    if vmem_limit_bytes is not None:
        cp_kwargs["vmem_limit_bytes"] = vmem_limit_bytes
    compiler_params = pltpu.CompilerParams(**cp_kwargs)

    if training:
        out = pl.pallas_call(
            _noisy_linear_train_kernel,
            out_shape=jax.ShapeDtypeStruct((Bp, Np), f32),
            grid_spec=pltpu.PrefetchScalarGridSpec(
                num_scalar_prefetch=0,
                grid=grid,
                in_specs=[x_spec, w_spec, w_spec, row_k_spec, row_n_spec,
                          row_n_spec],
                out_specs=out_spec),
            compiler_params=compiler_params,
        )(xp, prepared["wmu_t"], prepared["wsig_t"], prepared["ein_row"],
          prepared["eout_row"], prepared["bias_noisy"])
    else:
        out = pl.pallas_call(
            _noisy_linear_eval_kernel,
            out_shape=jax.ShapeDtypeStruct((Bp, Np), f32),
            grid_spec=pltpu.PrefetchScalarGridSpec(
                num_scalar_prefetch=0,
                grid=grid,
                in_specs=[x_spec, w_spec, row_n_spec],
                out_specs=out_spec),
            compiler_params=compiler_params,
        )(xp, prepared["wmu_t"], prepared["bias_mu_row"])

    return out[:B, :out_dim]


# --------------------- deterministic parameter setup ----------------------- #
def scale_noise(key, size):
    # noise = randn(size); noise.sign() * sqrt(|noise|)
    n = jax.random.normal(key, (size,), dtype=jnp.float32)
    return jnp.sign(n) * jnp.sqrt(jnp.abs(n))


def init_noisy_linear(key, input_dim, output_dim, std_init=0.5):
    # TODO(synk): reset_parameter/reset_noise RNG is done host-side with
    # jax.random (torch RNG semantics are not reproduced bit-for-bit).
    k_wmu, k_bmu, k_ein, k_eout, k_beps = jax.random.split(key, 5)
    mu_range = 1.0 / math.sqrt(input_dim)

    weight_mu = jax.random.uniform(k_wmu, (output_dim, input_dim),
                                   minval=-mu_range, maxval=mu_range,
                                   dtype=jnp.float32)
    bias_mu = jax.random.uniform(k_bmu, (output_dim,),
                                 minval=-mu_range, maxval=mu_range,
                                 dtype=jnp.float32)
    weight_sigma = jnp.full((output_dim, input_dim),
                            std_init / math.sqrt(input_dim), dtype=jnp.float32)
    bias_sigma = jnp.full((output_dim,),
                          std_init / math.sqrt(output_dim), dtype=jnp.float32)

    # Factored noise vectors; weight_epsilon = outer(eps_out, eps_in) is
    # formed algebraically inside the kernel. As in this module's
    # reset_noise(), bias_epsilon is an INDEPENDENT _scale_noise draw.
    eps_in = scale_noise(k_ein, input_dim)
    eps_out = scale_noise(k_eout, output_dim)
    bias_epsilon = scale_noise(k_beps, output_dim)

    return dict(weight_mu=weight_mu, weight_sigma=weight_sigma,
                bias_mu=bias_mu, bias_sigma=bias_sigma,
                eps_in=eps_in, eps_out=eps_out, bias_epsilon=bias_epsilon)


# --------------------------------- main ------------------------------------ #
if __name__ == "__main__":
    key = jax.random.PRNGKey(0)
    k_params, k_x = jax.random.split(key)

    batch, input_dim, output_dim = 8, 32, 64
    params = init_noisy_linear(k_params, input_dim, output_dim, std_init=0.5)
    prepared = prepare_noisy_linear(params)          # pad/cast/transpose once
    x = jax.random.normal(k_x, (batch, input_dim), dtype=jnp.float32)

    # ---- training path (noisy weights/bias) ----
    out_train = noisy_linear_forward(x, prepared, training=True)
    out_train = jax.block_until_ready(out_train)

    w_ref = params["weight_mu"] + params["weight_sigma"] * jnp.outer(
        params["eps_out"], params["eps_in"])
    b_ref = params["bias_mu"] + params["bias_sigma"] * params["bias_epsilon"]
    ref_train = x @ w_ref.T + b_ref
    assert out_train.shape == (batch, output_dim)
    # bf16 weight/activation streaming with f32 accumulation -> loose tol.
    assert jnp.allclose(out_train, ref_train, atol=3e-2, rtol=3e-2), \
        float(jnp.max(jnp.abs(out_train - ref_train)))

    # ---- eval path (mu parameters only) ----
    out_eval = noisy_linear_forward(x, prepared, training=False)
    out_eval = jax.block_until_ready(out_eval)

    ref_eval = x @ params["weight_mu"].T + params["bias_mu"]
    assert out_eval.shape == (batch, output_dim)
    assert jnp.allclose(out_eval, ref_eval, atol=3e-2, rtol=3e-2), \
        float(jnp.max(jnp.abs(out_eval - ref_eval)))

    print("KERNEL_OK")
</pallas_src>

<mosaic_0001>
module attributes {stable_mosaic.version = 11 : i64} {
  func.func @_noisy_linear_train_kernel(%arg0: i32, %arg1: i32, %arg2: memref<8x128xbf16, #tpu.memory_space<vmem>>, %arg3: memref<128x128xbf16, #tpu.memory_space<vmem>>, %arg4: memref<128x128xbf16, #tpu.memory_space<vmem>>, %arg5: memref<1x128xbf16, #tpu.memory_space<vmem>>, %arg6: memref<1x128xf32, #tpu.memory_space<vmem>>, %arg7: memref<1x128xf32, #tpu.memory_space<vmem>>, %arg8: memref<8x128xf32, #tpu.memory_space<vmem>>) attributes {dimension_semantics = [#tpu.dimension_semantics<parallel>, #tpu.dimension_semantics<arbitrary>], iteration_bounds = array<i64: 1, 1>, scalar_prefetch = 0 : i64, scratch_operands = 0 : i64, tpu.core_type = #tpu.core_type<tc>, window_params = [{transform_indices = @transform_0, window_bounds = array<i64: 8, 128>}, {transform_indices = @transform_1, window_bounds = array<i64: 128, 128>}, {transform_indices = @transform_2, window_bounds = array<i64: 128, 128>}, {transform_indices = @transform_3, window_bounds = array<i64: 1, 128>}, {transform_indices = @transform_4, window_bounds = array<i64: 1, 128>}, {transform_indices = @transform_5, window_bounds = array<i64: 1, 128>}, {transform_indices = @transform_6, window_bounds = array<i64: 8, 128>}]} {
    %c0_i32 = arith.constant 0 : i32
    %0 = arith.cmpi eq, %arg1, %c0_i32 : i32
    %1 = arith.extui %0 : i1 to i32
    %c0_i32_0 = arith.constant 0 : i32
    %2 = arith.cmpi ne, %1, %c0_i32_0 : i32
    scf.if %2 {
      %c0_15 = arith.constant 0 : index
      %c0_16 = arith.constant 0 : index
      %18 = vector.load %arg7[%c0_15, %c0_16] : memref<1x128xf32, #tpu.memory_space<vmem>>, vector<1x128xf32>
      %19 = vector.shape_cast %18 : vector<1x128xf32> to vector<1x128xf32>
      %20 = vector.broadcast %19 : vector<1x128xf32> to vector<8x128xf32>
      %c0_17 = arith.constant 0 : index
      %c0_18 = arith.constant 0 : index
      %21 = vector.load %arg8[%c0_17, %c0_18] : memref<8x128xf32, #tpu.memory_space<vmem>>, vector<8x128xf32>
      tpu.vector_store %arg8[%c0_17, %c0_18], %20 {strides = array<i32>} : memref<8x128xf32, #tpu.memory_space<vmem>>, vector<8x128xf32>,
    } else {
    }
    %c0 = arith.constant 0 : index
    %c0_1 = arith.constant 0 : index
    %3 = vector.load %arg2[%c0, %c0_1] : memref<8x128xbf16, #tpu.memory_space<vmem>>, vector<8x128xbf16>
    %c0_2 = arith.constant 0 : index
    %c0_3 = arith.constant 0 : index
    %4 = vector.load %arg3[%c0_2, %c0_3] : memref<128x128xbf16, #tpu.memory_space<vmem>>, vector<128x128xbf16>
    %cst = arith.constant dense<0.000000e+00> : vector<8x128xf32>
    %5 = tpu.matmul %3, %4, %cst {dimension_numbers = #tpu.dot_dimension_numbers<[1], [0], [0], [1], [0, 0, 1, 1], [], []>} : vector<8x128xbf16>, vector<128x128xbf16>, vector<8x128xf32> -> vector<8x128xf32>
    %c0_4 = arith.constant 0 : index
    %c0_5 = arith.constant 0 : index
    %6 = vector.load %arg5[%c0_4, %c0_5] : memref<1x128xbf16, #tpu.memory_space<vmem>>, vector<1x128xbf16>
    %7 = vector.broadcast %6 : vector<1x128xbf16> to vector<8x128xbf16>
    %8 = arith.mulf %3, %7 : vector<8x128xbf16>
    %c0_6 = arith.constant 0 : index
    %c0_7 = arith.constant 0 : index
    %9 = vector.load %arg4[%c0_6, %c0_7] : memref<128x128xbf16, #tpu.memory_space<vmem>>, vector<128x128xbf16>
    %cst_8 = arith.constant dense<0.000000e+00> : vector<8x128xf32>
    %10 = tpu.matmul %8, %9, %cst_8 {dimension_numbers = #tpu.dot_dimension_numbers<[1], [0], [0], [1], [0, 0, 1, 1], [], []>} : vector<8x128xbf16>, vector<128x128xbf16>, vector<8x128xf32> -> vector<8x128xf32>
    %c0_9 = arith.constant 0 : index
    %c0_10 = arith.constant 0 : index
    %11 = vector.load %arg8[%c0_9, %c0_10] : memref<8x128xf32, #tpu.memory_space<vmem>>, vector<8x128xf32>
    %c0_11 = arith.constant 0 : index
    %c0_12 = arith.constant 0 : index
    %12 = vector.load %arg6[%c0_11, %c0_12] : memref<1x128xf32, #tpu.memory_space<vmem>>, vector<1x128xf32>
    %13 = vector.broadcast %12 : vector<1x128xf32> to vector<8x128xf32>
    %14 = arith.mulf %13, %10 : vector<8x128xf32>
    %15 = arith.addf %5, %14 : vector<8x128xf32>
    %16 = arith.addf %11, %15 : vector<8x128xf32>
    %c0_13 = arith.constant 0 : index
    %c0_14 = arith.constant 0 : index
    %17 = vector.load %arg8[%c0_13, %c0_14] : memref<8x128xf32, #tpu.memory_space<vmem>>, vector<8x128xf32>
    tpu.vector_store %arg8[%c0_13, %c0_14], %16 {strides = array<i32>} : memref<8x128xf32, #tpu.memory_space<vmem>>, vector<8x128xf32>,
    return
  }
  func.func @transform_0(%arg0: i32, %arg1: i32) -> (i32, i32) {
    %c0_i32 = arith.constant 0 : i32
    %c0_i32_0 = arith.constant 0 : i32
    return %c0_i32, %arg1 : i32, i32
  }
  func.func @transform_1(%arg0: i32, %arg1: i32) -> (i32, i32) {
    %c0_i32 = arith.constant 0 : i32
    return %arg1, %arg0 : i32, i32
  }
  func.func @transform_2(%arg0: i32, %arg1: i32) -> (i32, i32) {
    %c0_i32 = arith.constant 0 : i32
    return %arg1, %arg0 : i32, i32
  }
  func.func @transform_3(%arg0: i32, %arg1: i32) -> (i32, i32) {
    %c0_i32 = arith.constant 0 : i32
    %c0_i32_0 = arith.constant 0 : i32
    return %c0_i32, %arg1 : i32, i32
  }
  func.func @transform_4(%arg0: i32, %arg1: i32) -> (i32, i32) {
    %c0_i32 = arith.constant 0 : i32
    %c0_i32_0 = arith.constant 0 : i32
    return %c0_i32, %arg0 : i32, i32
  }
  func.func @transform_5(%arg0: i32, %arg1: i32) -> (i32, i32) {
    %c0_i32 = arith.constant 0 : i32
    %c0_i32_0 = arith.constant 0 : i32
    return %c0_i32, %arg0 : i32, i32
  }
  func.func @transform_6(%arg0: i32, %arg1: i32) -> (i32, i32) {
    %c0_i32 = arith.constant 0 : i32
    %c0_i32_0 = arith.constant 0 : i32
    return %c0_i32, %arg0 : i32, i32
  }
}

</mosaic_0001>

<llo_original>
// kernel: tpu_custom_call.1
$region0: #{tpu_custom_call.1}
  #allocation0 [shape = 'u32[]', space=smem, size = 0x4, offset = 0x4, fixed_abs, tag = 'smem constant byte address 0x4 - core index']
  #allocation1 [shape = 'u32[144,128]{1,0:T(1,128)}', space=vmem, size = 0x12000, scoped, tag = 'internal scratch']
  %s0 = inlined_call_operand.hbm [shape: bf16[8,128], index: 0, kind: input, shape index: {}]
  %s1 = inlined_call_operand.hbm [shape: bf16[128,128], index: 1, kind: input, shape index: {}]
  %s2 = inlined_call_operand.hbm [shape: bf16[128,128], index: 2, kind: input, shape index: {}]
  %s3 = inlined_call_operand.vmem [shape: bf16[1,128], index: 3, kind: input, shape index: {}]
  %s4 = inlined_call_operand.vmem [shape: f32[1,128], index: 4, kind: input, shape index: {}]
  %s5 = inlined_call_operand.vmem [shape: f32[1,128], index: 5, kind: input, shape index: {}]
  %s6 = inlined_call_operand.hbm [shape: f32[8,128], index: 6, kind: output, shape index: {}]
  %s7 = sld [smem:[#allocation0]]
  $region50: #{tpu_custom_call.1} parent=0
    _
  %s9 = ssub.s32 1, %s7
  %s10 = scalar_select 0, %s9, %s7
  $region1: #{tpu_custom_call.1} parent=0
    #allocation2 [shape = 'u8[2048]{0}', space=vmem, size = 0x800, scoped, tag = 'input window, operand 0, single buffered']
    #allocation3 [shape = 's32[1]{0}', space=sflag, size = 0x4, scoped, tag = 'scoped memory for tpu_custom_call.1']
    #allocation4 [shape = 's32[1]{0}', space=sflag, size = 0x4, scoped, tag = 'scoped memory for tpu_custom_call.1']
    #allocation5 [shape = 'u8[32768]{0}', space=vmem, size = 0x8000, scoped, tag = 'input window, operand 1, single buffered']
    #allocation6 [shape = 's32[1]{0}', space=sflag, size = 0x4, scoped, tag = 'scoped memory for tpu_custom_call.1']
    #allocation7 [shape = 'u8[32768]{0}', space=vmem, size = 0x8000, scoped, tag = 'input window, operand 2, single buffered']
    #allocation8 [shape = 'u8[4096]{0}', space=vmem, size = 0x1000, scoped, tag = 'output window, operand 0, single buffered']
    %11 = vsyncpa [#allocation3], 0
    %12 = vsyncpa [#allocation6], 0
    %13 = vsyncpa [#allocation4], 0
    // Predicated region
    $region2: #{tpu_custom_call.1} parent=1 // pred_check
      _
    $region3: #{tpu_custom_call.1} parent=1 // pred_check_branch
      %15 = sbr.rel (0) target = $region5
    $region4: #{tpu_custom_call.1} parent=1 // pred_region
      %s17 = ssub.s32 64, 64
      %18 = vsyncadd [#allocation3], %s17
      %s20 = sshll.u32 [#allocation2], 4
      %s21 = int_to_ptr.vmem [resolvable:$true] %s20
      %23 = dma.hbm_to_vmem [thread:$0]  %s0, 64, %s21, [#allocation3]
    $region5: #{tpu_custom_call.1} parent=1 // pred_fallthru
      _
    // Predicated region
    $region6: #{tpu_custom_call.1} parent=1 // pred_check
      _
    $region7: #{tpu_custom_call.1} parent=1 // pred_check_branch
      %25 = sbr.rel (0) target = $region9
    $region8: #{tpu_custom_call.1} parent=1 // pred_region
      %s27 = ssub.s32 1024, 1024
      %28 = vsyncadd [#allocation6], %s27
      %s29 = sshll.u32 [#allocation5], 4
      %s30 = int_to_ptr.vmem [resolvable:$true] %s29
      %35 = dma.hbm_to_vmem [thread:$0]  %s1, 1024, %s30, [#allocation6], 64, 64, 4
    $region9: #{tpu_custom_call.1} parent=1 // pred_fallthru
      _
    // Predicated region
    $region10: #{tpu_custom_call.1} parent=1 // pred_check
      _
    $region11: #{tpu_custom_call.1} parent=1 // pred_check_branch
      %37 = sbr.rel (0) target = $region13
    $region12: #{tpu_custom_call.1} parent=1 // pred_region
      %s39 = ssub.s32 1024, 1024
      %40 = vsyncadd [#allocation6], %s39
      %s41 = sshll.u32 [#allocation7], 4
      %s42 = int_to_ptr.vmem [resolvable:$true] %s41
      %47 = dma.hbm_to_vmem [thread:$0]  %s2, 1024, %s42, [#allocation6], 64, 64, 4
    $region13: #{tpu_custom_call.1} parent=1 // pred_fallthru
      _
    // Predicated region
    $region14: #{tpu_custom_call.1} parent=1 // pred_check
      _
    $region15: #{tpu_custom_call.1} parent=1 // pred_check_branch
      %49 = sbr.rel (0) target = $region17
    $region16: #{tpu_custom_call.1} parent=1 // pred_region
      _
    $region17: #{tpu_custom_call.1} parent=1 // pred_fallthru
      _
    // Predicated region
    $region18: #{tpu_custom_call.1} parent=1 // pred_check
      _
    $region19: #{tpu_custom_call.1} parent=1 // pred_check_branch
      %51 = sbr.rel (0) target = $region21
    $region20: #{tpu_custom_call.1} parent=1 // pred_region
      _
    $region21: #{tpu_custom_call.1} parent=1 // pred_fallthru
      _
    // Predicated region
    $region22: #{tpu_custom_call.1} parent=1 // pred_check
      _
    $region23: #{tpu_custom_call.1} parent=1 // pred_check_branch
      %53 = sbr.rel (0) target = $region25
    $region24: #{tpu_custom_call.1} parent=1 // pred_region
      _
    $region25: #{tpu_custom_call.1} parent=1 // pred_fallthru
      _
    // Predicated region
    $region26: #{tpu_custom_call.1} parent=1 // pred_check
      _
    $region27: #{tpu_custom_call.1} parent=1 // pred_check_branch
      %55 = sbr.rel (0) target = $region29
    $region28: #{tpu_custom_call.1} parent=1 // pred_region
      %56 = dma.done [#allocation3], 64
    $region29: #{tpu_custom_call.1} parent=1 // pred_fallthru
      _
    // Predicated region
    $region30: #{tpu_custom_call.1} parent=1 // pred_check
      _
    $region31: #{tpu_custom_call.1} parent=1 // pred_check_branch
      %58 = sbr.rel (0) target = $region33
    $region32: #{tpu_custom_call.1} parent=1 // pred_region
      %59 = dma.done [#allocation6], 1024
    $region33: #{tpu_custom_call.1} parent=1 // pred_fallthru
      _
    // Predicated region
    $region34: #{tpu_custom_call.1} parent=1 // pred_check
      _
    $region35: #{tpu_custom_call.1} parent=1 // pred_check_branch
      %61 = sbr.rel (0) target = $region37
    $region36: #{tpu_custom_call.1} parent=1 // pred_region
      %62 = dma.done [#allocation6], 1024
    $region37: #{tpu_custom_call.1} parent=1 // pred_fallthru
      _
    %p64 = scmp.eq.s32.totalorder 0, 0
    // Predicated region
    $region38: #{tpu_custom_call.1} parent=1 // pred_check
      %p65 = pneg %p64
    $region39: #{tpu_custom_call.1} parent=1 // pred_check_branch
      %67 = sbr.rel (%p65) target = $region41
    $region40: #{tpu_custom_call.1} parent=1 // pred_region
      %v68 = vld [vmem:[%s5] sm:$0x1]
      %v70 = vlaneseq
      %v71 = vshrl.u32 %v70, 7
      %v72 = vsub.s32 0, %v71
      %v73 = vrot.slane %v68, %v72
      %75 = vst [vmem:[#allocation8] sm:$0xff] %v73
    $region41: #{tpu_custom_call.1} parent=1 // pred_fallthru
      _
    %v76 = vld [vmem:[#allocation2] sm:$0xf]
    %v77 = vld [vmem:[#allocation5] sm:$0xf]
    %v78 = vld [vmem:[#allocation5 + $0x4] sm:$0xf]
    %v79 = vld [vmem:[#allocation5 + $0x8] sm:$0xf]
    %v80 = vld [vmem:[#allocation5 + $0xc] sm:$0xf]
    %v81 = vld [vmem:[#allocation5 + $0x10] sm:$0xf]
    %v82 = vld [vmem:[#allocation5 + $0x14] sm:$0xf]
    %v83 = vld [vmem:[#allocation5 + $0x18] sm:$0xf]
    %v84 = vld [vmem:[#allocation5 + $0x1c] sm:$0xf]
    %v85 = vld [vmem:[#allocation5 + $0x20] sm:$0xf]
    %v86 = vld [vmem:[#allocation5 + $0x24] sm:$0xf]
    %v87 = vld [vmem:[#allocation5 + $0x28] sm:$0xf]
    %v88 = vld [vmem:[#allocation5 + $0x2c] sm:$0xf]
    %v89 = vld [vmem:[#allocation5 + $0x30] sm:$0xf]
    %v90 = vld [vmem:[#allocation5 + $0x34] sm:$0xf]
    %v91 = vld [vmem:[#allocation5 + $0x38] sm:$0xf]
    %v92 = vld [vmem:[#allocation5 + $0x3c] sm:$0xf]
    %v93 = vld [vmem:[%s3] sm:$0x1]
    %v95 = vpack.i.b16 %v93, %v93
    %v97 = vlaneseq
    %v98 = vshrl.u32 %v97, 7
    %v99 = vsub.s32 0, %v98
    %v100 = vrot.slane %v95, %v99
    %v101 = vmul.bf16 %v76, %v100
    %v102 = vld [vmem:[#allocation7] sm:$0xf]
    %v103 = vld [vmem:[#allocation7 + $0x4] sm:$0xf]
    %v104 = vld [vmem:[#allocation7 + $0x8] sm:$0xf]
    %v105 = vld [vmem:[#allocation7 + $0xc] sm:$0xf]
    %v106 = vld [vmem:[#allocation7 + $0x10] sm:$0xf]
    %v107 = vld [vmem:[#allocation7 + $0x14] sm:$0xf]
    %v108 = vld [vmem:[#allocation7 + $0x18] sm:$0xf]
    %v109 = vld [vmem:[#allocation7 + $0x1c] sm:$0xf]
    %v110 = vld [vmem:[#allocation7 + $0x20] sm:$0xf]
    %v111 = vld [vmem:[#allocation7 + $0x24] sm:$0xf]
    %v112 = vld [vmem:[#allocation7 + $0x28] sm:$0xf]
    %v113 = vld [vmem:[#allocation7 + $0x2c] sm:$0xf]
    %v114 = vld [vmem:[#allocation7 + $0x30] sm:$0xf]
    %v115 = vld [vmem:[#allocation7 + $0x34] sm:$0xf]
    %v116 = vld [vmem:[#allocation7 + $0x38] sm:$0xf]
    %v117 = vld [vmem:[#allocation7 + $0x3c] sm:$0xf]
    %v134 = vunpack.c.l.b16 %v102
    %v135 = vunpack.c.l.b16 %v103
    %v136 = vunpack.c.l.b16 %v104
    %v137 = vunpack.c.l.b16 %v105
    %v138 = vunpack.c.l.b16 %v106
    %v139 = vunpack.c.l.b16 %v107
    %v140 = vunpack.c.l.b16 %v108
    %v141 = vunpack.c.l.b16 %v109
    %v142 = vunpack.c.l.b16 %v110
    %v143 = vunpack.c.l.b16 %v111
    %v144 = vunpack.c.l.b16 %v112
    %v145 = vunpack.c.l.b16 %v113
    %v146 = vunpack.c.l.b16 %v114
    %v147 = vunpack.c.l.b16 %v115
    %v148 = vunpack.c.l.b16 %v116
    %v149 = vunpack.c.l.b16 %v117
    %v150 = vpack.c.b16 %v135, %v134
    %v151 = vpack.c.b16 %v137, %v136
    %v152 = vpack.c.b16 %v139, %v138
    %v153 = vpack.c.b16 %v141, %v140
    %v154 = vpack.c.b16 %v143, %v142
    %v155 = vpack.c.b16 %v145, %v144
    %v156 = vpack.c.b16 %v147, %v146
    %v157 = vpack.c.b16 %v149, %v148
    %166 = vmatprep.subr.bf16.mxu0 0
    %167 = vmatpush1.bf16.msra.mxu0 %v150
    %168 = vmatprep.subr.bf16.mxu0 0
    %169 = vmatpush1.bf16.msra.mxu0 %v151
    %170 = vmatprep.subr.bf16.mxu0 0
    %171 = vmatpush1.bf16.msra.mxu0 %v152
    %172 = vmatprep.subr.bf16.mxu0 0
    %173 = vmatpush1.bf16.msra.mxu0 %v153
    %174 = vmatprep.subr.bf16.mxu0 0
    %175 = vmatpush1.bf16.msra.mxu0 %v154
    %176 = vmatprep.subr.bf16.mxu0 0
    %177 = vmatpush1.bf16.msra.mxu0 %v155
    %178 = vmatprep.subr.bf16.mxu0 0
    %179 = vmatpush1.bf16.msra.mxu0 %v156
    %180 = vmatprep.subr.bf16.mxu0 0
    %181 = vmatpush1.bf16.msra.mxu0 %v157
    %182 = vmatprep.subr.bf16.mxu0 0
    %183 = vmatpush1.bf16.msra.mxu0 0
    %184 = vmatprep.subr.bf16.mxu0 0
    %185 = vmatpush1.bf16.msra.mxu0 0
    %186 = vmatprep.subr.bf16.mxu0 0
    %187 = vmatpush1.bf16.msra.mxu0 0
    %188 = vmatprep.subr.bf16.mxu0 0
    %189 = vmatpush1.bf16.msra.mxu0 0
    %190 = vmatprep.subr.bf16.mxu0 0
    %191 = vmatpush1.bf16.msra.mxu0 0
    %192 = vmatprep.subr.bf16.mxu0 0
    %193 = vmatpush1.bf16.msra.mxu0 0
    %194 = vmatprep.subr.bf16.mxu0 0
    %195 = vmatpush1.bf16.msra.mxu0 0
    %196 = vmatprep.subr.bf16.mxu0 0
    %197 = vmatpush1.bf16.msra.mxu0 0
    %198 = vmatprep.mubr.bf16.mxu0 0
    %199 = vmatmul.mubr.bf16.gmra.mrb[0].mxu0 %v101
    %v200 = vpop.f32.mrb[0].mxu0
    %v201 = vadd.f32 0.0, %v200
    %v202 = vpop.f32.mrb[0].mxu0
    %v203 = vpop.f32.mrb[0].mxu0
    %v204 = vpop.f32.mrb[0].mxu0
    %205 = vdwg.mxu0
    %v206 = vld [vmem:[#allocation8] sm:$0xff]
    %v207 = vld [vmem:[%s4] sm:$0x1]
    %v209 = vlaneseq
    %v210 = vshrl.u32 %v209, 7
    %v211 = vsub.s32 0, %v210
    %v212 = vrot.slane %v207, %v211
    %v214 = vmul.f32 %v212, %v201
    %v231 = vunpack.c.l.b16 %v77
    %v232 = vunpack.c.l.b16 %v78
    %v233 = vunpack.c.l.b16 %v79
    %v234 = vunpack.c.l.b16 %v80
    %v235 = vunpack.c.l.b16 %v81
    %v236 = vunpack.c.l.b16 %v82
    %v237 = vunpack.c.l.b16 %v83
    %v238 = vunpack.c.l.b16 %v84
    %v239 = vunpack.c.l.b16 %v85
    %v240 = vunpack.c.l.b16 %v86
    %v241 = vunpack.c.l.b16 %v87
    %v242 = vunpack.c.l.b16 %v88
    %v243 = vunpack.c.l.b16 %v89
    %v244 = vunpack.c.l.b16 %v90
    %v245 = vunpack.c.l.b16 %v91
    %v246 = vunpack.c.l.b16 %v92
    %v247 = vpack.c.b16 %v232, %v231
    %v248 = vpack.c.b16 %v234, %v233
    %v249 = vpack.c.b16 %v236, %v235
    %v250 = vpack.c.b16 %v238, %v237
    %v251 = vpack.c.b16 %v240, %v239
    %v252 = vpack.c.b16 %v242, %v241
    %v253 = vpack.c.b16 %v244, %v243
    %v254 = vpack.c.b16 %v246, %v245
    %263 = vmatprep.subr.bf16.mxu0 0
    %264 = vmatpush1.bf16.msra.mxu0 %v247
    %265 = vmatprep.subr.bf16.mxu0 0
    %266 = vmatpush1.bf16.msra.mxu0 %v248
    %267 = vmatprep.subr.bf16.mxu0 0
    %268 = vmatpush1.bf16.msra.mxu0 %v249
    %269 = vmatprep.subr.bf16.mxu0 0
    %270 = vmatpush1.bf16.msra.mxu0 %v250
    %271 = vmatprep.subr.bf16.mxu0 0
    %272 = vmatpush1.bf16.msra.mxu0 %v251
    %273 = vmatprep.subr.bf16.mxu0 0
    %274 = vmatpush1.bf16.msra.mxu0 %v252
    %275 = vmatprep.subr.bf16.mxu0 0
    %276 = vmatpush1.bf16.msra.mxu0 %v253
    %277 = vmatprep.subr.bf16.mxu0 0
    %278 = vmatpush1.bf16.msra.mxu0 %v254
    %279 = vmatprep.subr.bf16.mxu0 0
    %280 = vmatpush1.bf16.msra.mxu0 0
    %281 = vmatprep.subr.bf16.mxu0 0
    %282 = vmatpush1.bf16.msra.mxu0 0
    %283 = vmatprep.subr.bf16.mxu0 0
    %284 = vmatpush1.bf16.msra.mxu0 0
    %285 = vmatprep.subr.bf16.mxu0 0
    %286 = vmatpush1.bf16.msra.mxu0 0
    %287 = vmatprep.subr.bf16.mxu0 0
    %288 = vmatpush1.bf16.msra.mxu0 0
    %289 = vmatprep.subr.bf16.mxu0 0
    %290 = vmatpush1.bf16.msra.mxu0 0
    %291 = vmatprep.subr.bf16.mxu0 0
    %292 = vmatpush1.bf16.msra.mxu0 0
    %293 = vmatprep.subr.bf16.mxu0 0
    %294 = vmatpush1.bf16.msra.mxu0 0
    %295 = vmatprep.mubr.bf16.mxu0 0
    %296 = vmatmul.mubr.bf16.gmra.mrb[0].mxu0 %v76
    %v297 = vpop.f32.mrb[0].mxu0
    %v298 = vadd.f32 %v214, %v297
    %v299 = vpop.f32.mrb[0].mxu0
    %v300 = vpop.f32.mrb[0].mxu0
    %v301 = vpop.f32.mrb[0].mxu0
    %302 = vdwg.mxu0
    %v303 = vadd.f32 %v206, %v298
    %304 = vst [vmem:[#allocation8] sm:$0xff] %v303
    // Predicated region
    $region42: #{tpu_custom_call.1} parent=1 // pred_check
      _
    $region43: #{tpu_custom_call.1} parent=1 // pred_check_branch
      %306 = sbr.rel (0) target = $region45
    $region44: #{tpu_custom_call.1} parent=1 // pred_region
      %s308 = ssub.s32 128, 128
      %309 = vsyncadd [#allocation4], %s308
      %s311 = sshll.u32 [#allocation8], 4
      %s312 = int_to_ptr.vmem [resolvable:$true] %s311
      %314 = dma.vmem_to_hbm [thread:$0]  %s312, 128, %s6, [#allocation4]
    $region45: #{tpu_custom_call.1} parent=1 // pred_fallthru
      _
    // Predicated region
    $region46: #{tpu_custom_call.1} parent=1 // pred_check
      _
    $region47: #{tpu_custom_call.1} parent=1 // pred_check_branch
      %316 = sbr.rel (0) target = $region49
    $region48: #{tpu_custom_call.1} parent=1 // pred_region
      %317 = dma.done [#allocation4], 128
    $region49: #{tpu_custom_call.1} parent=1 // pred_fallthru
      _
    %318 = vsyncpa [#allocation3], 1
    %319 = vsyncpa [#allocation6], 1
    %320 = vsyncpa [#allocation4], 1

</llo_original>
